<compile_context>
chip_gen: v6e
topology: v6e:2x2x1
jax: 0.10.0
libtpu: 0.0.40
codegen_flags: <defaults>
</compile_context>

<pallas_src>
import functools

import jax
import jax.numpy as jnp
from jax import lax
from jax.experimental import pallas as pl
from jax.experimental.pallas import tpu as pltpu

_BIG = 1e9  # sentinel for "no active pixel yet" in the bbox partials


def _vmem_limit_bytes():
    """Per-generation VMEM budget: 3/4 of physical (96 MiB v5e/v6e, 48 MiB v7x)."""
    cap = 128 * 1024 * 1024
    try:
        info = pltpu.get_tpu_info()
        cap = int(getattr(info, "vmem_capacity_bytes", cap))
    except Exception:
        pass
    return (cap * 3) // 4


def _pick_tile_n(hw, n_prop, cp, vmem_limit):
    """Largest multiple-of-128 divisor of hw whose double-buffered tiles fit the budget."""
    if hw % 128 != 0:
        raise ValueError("mask H*W must be a multiple of 128 for lane-dense tiling")
    # Per-lane VMEM cost: 2 buffers of bf16 mask out + 2 buffers of bf16 proto in.
    bytes_per_lane = 2 * n_prop * 2 + 2 * cp * 2
    budget = int(vmem_limit * 0.6)  # headroom for coeffs, partials, runtime scratch
    cap = max(128, (budget // bytes_per_lane) // 128 * 128)
    best = None
    t = 128
    limit = min(cap, hw)
    while t <= limit:
        if hw % t == 0:
            best = t
        t += 128
    return best


def _prologue_kernel(img_ref, wcoef_ref, coef_ref, *, normalize):
    """Normalize + quantize the image, then coefficient matmul (+relu). Runs once."""
    x = img_ref[...].astype(jnp.float32)
    if normalize:  # static: non-uint8 input branch of the PyTorch reference
        mn = jnp.min(x)
        mx = jnp.max(x)
        inv = 1.0 / jnp.maximum(mx - mn, jnp.float32(1e-12))  # guard constant image
        x = 255.0 * (x - mn) * inv
        x = jnp.floor(jnp.clip(x, 0.0, 255.0))  # matches np .astype(uint8) truncation
    feats = (x * jnp.float32(1.0 / 255.0)).astype(jnp.bfloat16)
    coef = jnp.dot(feats, wcoef_ref[...], preferred_element_type=jnp.float32)
    coef_ref[...] = jnp.maximum(coef, 0.0).astype(coef_ref.dtype)


def _mask_tile_kernel(coef_ref, proto_ref, mask_ref, part_ref, *, wm, tile_n):
    """Per-tile: prototype matmul -> sigmoid -> bf16 store, plus bbox min partials."""
    j = pl.program_id(0)

    logits = jnp.dot(coef_ref[...], proto_ref[...], preferred_element_type=jnp.float32)
    # bf16 store halves the dominant HBM writeback stream.
    mask_ref[...] = jax.nn.sigmoid(logits).astype(mask_ref.dtype)

    # Exact integer pixel coordinates (wm is a compile-time constant).
    idx = j * tile_n + lax.broadcasted_iota(jnp.int32, logits.shape, 1)
    row = (idx // wm).astype(jnp.float32)
    col = (idx % wm).astype(jnp.float32)

    active = logits > 0.0            # == sigmoid > 0.5, off the EUP critical path
    big = jnp.float32(_BIG)
    # Four single-column stores (no per-tile concatenate / lane relayout).
    part_ref[:, 0:1] = jnp.min(jnp.where(active, col, big), axis=1, keepdims=True)
    part_ref[:, 1:2] = jnp.min(jnp.where(active, row, big), axis=1, keepdims=True)
    part_ref[:, 2:3] = jnp.min(jnp.where(active, -col, big), axis=1, keepdims=True)
    part_ref[:, 3:4] = jnp.min(jnp.where(active, -row, big), axis=1, keepdims=True)


def fast_sam_mask_generator_forward(image, w_coef, prototypes, n_prop, hm, wm,
                                    tile_n=None):
    """Mirrors FastSAMMaskGenerator.get_proposals with a synthetic mask head."""
    H, W, C = image.shape
    hw = hm * wm
    total = H * W * C
    assert total % n_prop == 0, "image elements must split evenly into proposal strips"
    d = total // n_prop
    cp = w_coef.shape[1]
    assert w_coef.shape == (d, cp)
    assert prototypes.shape == (cp, hw)

    vmem_limit = _vmem_limit_bytes()
    if tile_n is None:
        tile_n = _pick_tile_n(hw, n_prop, cp, vmem_limit)
    assert tile_n is not None and hw % tile_n == 0 and tile_n % 128 == 0
    n_tiles = hw // tile_n

    normalize = image.dtype != jnp.uint8
    feats_view = image.reshape(n_prop, d)           # no dtype widening in the wrapper
    w_coef_b = w_coef.astype(jnp.bfloat16)          # bf16 operands feed the MXU natively
    proto_b = prototypes.astype(jnp.bfloat16)

    # ---- Kernel 1: one-shot prologue (normalize + quantize + coefficient head) ----
    coef = pl.pallas_call(
        functools.partial(_prologue_kernel, normalize=normalize),
        out_shape=jax.ShapeDtypeStruct((n_prop, cp), jnp.bfloat16),
        grid_spec=pltpu.PrefetchScalarGridSpec(
            num_scalar_prefetch=0,
            grid=(1,),
            in_specs=[
                pl.BlockSpec((n_prop, d), lambda i: (0, 0)),
                pl.BlockSpec((d, cp), lambda i: (0, 0)),
            ],
            out_specs=pl.BlockSpec((n_prop, cp), lambda i: (0, 0)),
        ),
        compiler_params=pltpu.CompilerParams(
            dimension_semantics=("arbitrary",),
            vmem_limit_bytes=vmem_limit,
        ),
    )(feats_view, w_coef_b)

    # ---- Kernel 2: mask tiles + per-tile bbox partials, "parallel" grid over H*W ----
    masks_flat, partials = pl.pallas_call(
        functools.partial(_mask_tile_kernel, wm=wm, tile_n=tile_n),
        out_shape=(
            jax.ShapeDtypeStruct((n_prop, hw), jnp.bfloat16),       # bf16 mask output
            jax.ShapeDtypeStruct((n_tiles, n_prop, 4), jnp.float32),
        ),
        grid_spec=pltpu.PrefetchScalarGridSpec(
            num_scalar_prefetch=0,
            grid=(n_tiles,),
            in_specs=[
                pl.BlockSpec((n_prop, cp), lambda j: (0, 0)),        # coeffs (tiny, resident)
                pl.BlockSpec((cp, tile_n), lambda j: (0, j)),        # prototype tile (streamed)
            ],
            out_specs=[
                pl.BlockSpec((n_prop, tile_n), lambda j: (0, j)),    # lane-dense bf16 mask tile
                pl.BlockSpec((None, n_prop, 4), lambda j: (j, 0, 0)),
            ],
        ),
        compiler_params=pltpu.CompilerParams(
            dimension_semantics=("parallel",),    # no cross-step state -> megacore-shardable
            vmem_limit_bytes=vmem_limit,
        ),
    )(coef, proto_b)

    # Final bbox reduction: a few-element jnp.min in the wrapper (keeps the grid parallel).
    acc = jnp.min(partials, axis=0)                              # (n_prop, 4)
    xmin, ymin = acc[:, 0], acc[:, 1]
    xmax, ymax = -acc[:, 2], -acc[:, 3]
    valid = xmin < (0.5 * _BIG)                                  # proposal had >=1 active pixel
    boxes = jnp.stack([xmin, ymin, xmax + 1.0, ymax + 1.0], axis=1)
    bboxes = jnp.where(valid[:, None], boxes, 0.0)

    masks = masks_flat.reshape(n_prop, hm, wm)
    return {
        "bboxes": bboxes.astype(jnp.float32),   # (N, 4) xyxy; zero box for empty proposals
        "masks": masks,                         # (N, Hm, Wm) bf16 in [0, 1]
        "bbox_fmt": "xyxy",
        "image_height": H,
        "image_width": W,
    }


if __name__ == "__main__":
    key = jax.random.PRNGKey(0)
    k_img, k_w, k_p = jax.random.split(key, 3)

    # Small shapes consistent with the forward: an HWC float image (non-uint8 branch).
    H, W, C = 16, 16, 3
    N_PROP = 8            # number of mask proposals
    Hm, Wm = 16, 16       # mask resolution -> HW = 256
    C_PROTO = 32          # prototype channels
    D = (H * W * C) // N_PROP   # per-strip feature dim = 96

    image = jax.random.uniform(k_img, (H, W, C), dtype=jnp.float32)

    # Deterministic synthetic parameters (FastSAM checkpoint not loadable here).
    w_coef = 0.05 * jax.random.normal(k_w, (D, C_PROTO), dtype=jnp.float32)
    prototypes = 0.05 * jax.random.normal(k_p, (C_PROTO, Hm * Wm), dtype=jnp.float32)

    # tile_n=128 -> 2 grid steps, exercising the per-tile partials + wrapper reduce path.
    instances = fast_sam_mask_generator_forward(
        image, w_coef, prototypes, N_PROP, Hm, Wm, tile_n=128)

    masks = jax.block_until_ready(instances["masks"])
    bboxes = jax.block_until_ready(instances["bboxes"])

    assert masks.shape == (N_PROP, Hm, Wm)
    assert bboxes.shape == (N_PROP, 4)
    assert bool(jnp.isfinite(masks.astype(jnp.float32)).all())
    assert bool(jnp.isfinite(bboxes).all())

    # Pure-JAX f32 reference for the mask values (kernel uses bf16 operands/output).
    img = image.astype(jnp.float32).reshape(N_PROP, D)
    mn, mx = jnp.min(img), jnp.max(img)
    q = jnp.floor(jnp.clip(255.0 * (img - mn) / jnp.maximum(mx - mn, 1e-12), 0.0, 255.0))
    coef_ref = jnp.maximum((q / 255.0) @ w_coef, 0.0)
    masks_ref = jax.nn.sigmoid(coef_ref @ prototypes).reshape(N_PROP, Hm, Wm)
    err = float(jnp.max(jnp.abs(masks_ref - masks.astype(jnp.float32))))
    assert err < 3e-2, f"mask mismatch vs reference: {err}"

    print("KERNEL_OK")
</pallas_src>

<mosaic_0001>
module attributes {stable_mosaic.version = 11 : i64} {
  func.func @_prologue_kernel(%arg0: i32, %arg1: memref<8x96xf32, #tpu.memory_space<vmem>>, %arg2: memref<96x32xbf16, #tpu.memory_space<vmem>>, %arg3: memref<8x32xbf16, #tpu.memory_space<vmem>>) attributes {dimension_semantics = [#tpu.dimension_semantics<arbitrary>], iteration_bounds = array<i64: 1>, scalar_prefetch = 0 : i64, scratch_operands = 0 : i64, tpu.core_type = #tpu.core_type<tc>, window_params = [{pipeline_mode = #tpu.pipeline_mode<synchronous>, transform_indices = @transform_0, window_bounds = array<i64: 8, 96>}, {pipeline_mode = #tpu.pipeline_mode<synchronous>, transform_indices = @transform_1, window_bounds = array<i64: 96, 32>}, {pipeline_mode = #tpu.pipeline_mode<synchronous>, transform_indices = @transform_2, window_bounds = array<i64: 8, 32>}]} {
    %c0 = arith.constant 0 : index
    %c0_0 = arith.constant 0 : index
    %0 = vector.load %arg1[%c0, %c0_0] : memref<8x96xf32, #tpu.memory_space<vmem>>, vector<8x96xf32>
    %1 = vector.shape_cast %0 : vector<8x96xf32> to vector<1x8x96xf32>
    %cst = arith.constant dense<0x7F800000> : vector<1xf32>
    %2 = vector.multi_reduction <minimumf>, %1, %cst [1, 2] : vector<1x8x96xf32> to vector<1xf32>
    %3 = vector.shape_cast %2 : vector<1xf32> to vector<1x1x1xf32>
    %4 = vector.extract %3[0, 0, 0] : f32 from vector<1x1x1xf32>
    %5 = vector.shape_cast %0 : vector<8x96xf32> to vector<1x8x96xf32>
    %cst_1 = arith.constant dense<0xFF800000> : vector<1xf32>
    %6 = vector.multi_reduction <maximumf>, %5, %cst_1 [1, 2] : vector<1x8x96xf32> to vector<1xf32>
    %7 = vector.shape_cast %6 : vector<1xf32> to vector<1x1x1xf32>
    %8 = vector.extract %7[0, 0, 0] : f32 from vector<1x1x1xf32>
    %9 = arith.subf %8, %4 : f32
    %cst_2 = arith.constant 9.99999996E-13 : f32
    %10 = arith.maximumf %9, %cst_2 : f32
    %cst_3 = arith.constant 1.000000e+00 : f32
    %11 = arith.divf %cst_3, %10 : f32
    %12 = vector.broadcast %4 : f32 to vector<8x96xf32>
    %13 = arith.subf %0, %12 : vector<8x96xf32>
    %cst_4 = arith.constant 2.550000e+02 : f32
    %14 = vector.broadcast %cst_4 : f32 to vector<8x96xf32>
    %15 = arith.mulf %14, %13 : vector<8x96xf32>
    %16 = vector.broadcast %11 : f32 to vector<8x96xf32>
    %17 = arith.mulf %15, %16 : vector<8x96xf32>
    %cst_5 = arith.constant 0.000000e+00 : f32
    %cst_6 = arith.constant 2.550000e+02 : f32
    %18 = vector.broadcast %cst_5 : f32 to vector<8x96xf32>
    %19 = arith.maximumf %18, %17 : vector<8x96xf32>
    %20 = vector.broadcast %cst_6 : f32 to vector<8x96xf32>
    %21 = arith.minimumf %20, %19 : vector<8x96xf32>
    %22 = math.floor %21 : vector<8x96xf32>
    %cst_7 = arith.constant 0.00392156886 : f32
    %23 = vector.broadcast %cst_7 : f32 to vector<8x96xf32>
    %24 = arith.mulf %22, %23 : vector<8x96xf32>
    %25 = arith.truncf %24 : vector<8x96xf32> to vector<8x96xbf16>
    %c0_8 = arith.constant 0 : index
    %c0_9 = arith.constant 0 : index
    %26 = vector.load %arg2[%c0_8, %c0_9] : memref<96x32xbf16, #tpu.memory_space<vmem>>, vector<96x32xbf16>
    %cst_10 = arith.constant dense<0.000000e+00> : vector<8x32xf32>
    %27 = tpu.matmul %25, %26, %cst_10 {dimension_numbers = #tpu.dot_dimension_numbers<[1], [0], [0], [1], [0, 0, 1, 1], [], []>} : vector<8x96xbf16>, vector<96x32xbf16>, vector<8x32xf32> -> vector<8x32xf32>
    %cst_11 = arith.constant 0.000000e+00 : f32
    %28 = vector.broadcast %cst_11 : f32 to vector<8x32xf32>
    %29 = arith.maximumf %27, %28 : vector<8x32xf32>
    %30 = arith.truncf %29 : vector<8x32xf32> to vector<8x32xbf16>
    %c0_12 = arith.constant 0 : index
    %c0_13 = arith.constant 0 : index
    %31 = vector.load %arg3[%c0_12, %c0_13] : memref<8x32xbf16, #tpu.memory_space<vmem>>, vector<8x32xbf16>
    tpu.vector_store %arg3[%c0_12, %c0_13], %30 {strides = array<i32>} : memref<8x32xbf16, #tpu.memory_space<vmem>>, vector<8x32xbf16>,
    return
  }
  func.func @transform_0(%arg0: i32) -> (i32, i32) {
    %c0_i32 = arith.constant 0 : i32
    %c0_i32_0 = arith.constant 0 : i32
    %c0_i32_1 = arith.constant 0 : i32
    return %c0_i32, %c0_i32_0 : i32, i32
  }
  func.func @transform_1(%arg0: i32) -> (i32, i32) {
    %c0_i32 = arith.constant 0 : i32
    %c0_i32_0 = arith.constant 0 : i32
    %c0_i32_1 = arith.constant 0 : i32
    return %c0_i32, %c0_i32_0 : i32, i32
  }
  func.func @transform_2(%arg0: i32) -> (i32, i32) {
    %c0_i32 = arith.constant 0 : i32
    %c0_i32_0 = arith.constant 0 : i32
    %c0_i32_1 = arith.constant 0 : i32
    return %c0_i32, %c0_i32_0 : i32, i32
  }
}

</mosaic_0001>

<llo_original>
// kernel: tpu_custom_call.1
$region0: #{tpu_custom_call.1}
  #allocation0 [shape = 'u32[]', space=smem, size = 0x4, offset = 0x4, fixed_abs, tag = 'smem constant byte address 0x4 - core index']
  #allocation1 [shape = 'u32[144,128]{1,0:T(1,128)}', space=vmem, size = 0x12000, scoped, tag = 'internal scratch']
  %s0 = inlined_call_operand.vmem [shape: f32[8,96], index: 0, kind: input, shape index: {}]
  %s1 = inlined_call_operand.vmem [shape: bf16[96,32], index: 1, kind: input, shape index: {}]
  %s2 = inlined_call_operand.hbm [shape: bf16[8,32], index: 2, kind: output, shape index: {}]
  %s3 = sld [smem:[#allocation0]]
  $region18: #{tpu_custom_call.1} parent=0
    _
  %s5 = ssub.s32 1, %s3
  %s6 = scalar_select 0, %s5, %s3
  $region1: #{tpu_custom_call.1} parent=0
    #allocation2 [shape = 'u8[2048]{0}', space=vmem, size = 0x800, scoped, tag = 'output window, operand 0, single buffered']
    #allocation3 [shape = 's32[1]{0}', space=sflag, size = 0x4, scoped, tag = 'scoped memory for tpu_custom_call.1']
    %7 = vsyncpa [#allocation3], 0
    // Predicated region
    $region2: #{tpu_custom_call.1} parent=1 // pred_check
      _
    $region3: #{tpu_custom_call.1} parent=1 // pred_check_branch
      %9 = sbr.rel (0) target = $region5
    $region4: #{tpu_custom_call.1} parent=1 // pred_region
      _
    $region5: #{tpu_custom_call.1} parent=1 // pred_fallthru
      _
    // Predicated region
    $region6: #{tpu_custom_call.1} parent=1 // pred_check
      _
    $region7: #{tpu_custom_call.1} parent=1 // pred_check_branch
      %11 = sbr.rel (0) target = $region9
    $region8: #{tpu_custom_call.1} parent=1 // pred_region
      _
    $region9: #{tpu_custom_call.1} parent=1 // pred_fallthru
      _
    %v13 = vld [vmem:[%s0] sm:$0xff]
    %vm14 = vcmask 785408
    %v15 = vsel %vm14, %v13, inf
    %16 = vmin.xlane.f32.xlu0 %v15
    %v17 = vpop.xlane.xlu0 %16
    %v18 = vrot.slane %v17, 4
    %v19 = vmin.f32 %v17, %v18
    %v20 = vrot.slane %v19, 2
    %v21 = vmin.f32 %v19, %v20
    %v22 = vrot.slane %v21, 1
    %v23 = vmin.f32 %v21, %v22
    %s24 = vtos %v23
    %v25 = vsel %vm14, %v13, -inf
    %26 = vmax.xlane.f32.xlu0 %v25
    %v27 = vpop.xlane.xlu0 %26
    %v28 = vrot.slane %v27, 4
    %v29 = vmax.f32 %v27, %v28
    %v30 = vrot.slane %v29, 2
    %v31 = vmax.f32 %v29, %v30
    %v32 = vrot.slane %v31, 1
    %v33 = vmax.f32 %v31, %v32
    %s34 = vtos %v33
    %s35 = ssub.f32 %s34, %s24
    %s36 = smax.f32 %s35, 1e-12
    %v37 = vstv %s36
    %v38 = vrcp.pop %v37
    %s39 = vtos %v38
    %v40 = vstv %s24
    %v41 = vsub.f32 %v13, %v40
    %v42 = vmul.f32 %v41, 255.0
    %v43 = vstv %s39
    %v44 = vmul.f32 %v42, %v43
    %v45 = vmax.f32 %v44, 0.0
    %v46 = vmin.f32 %v45, 255.0
    %v47 = vfloor.f32 %v46
    %v48 = vmul.f32 %v47, 0.003921569
    %v49 = vpack.c.bf16 %v48, %v48
    %v50 = vld [vmem:[%s1] sm:$0xf]
    %v51 = vld [vmem:[%s1 + $0x4] sm:$0xf]
    %v52 = vld [vmem:[%s1 + $0x8] sm:$0xf]
    %v53 = vld [vmem:[%s1 + $0xc] sm:$0xf]
    %v54 = vld [vmem:[%s1 + $0x10] sm:$0xf]
    %v55 = vld [vmem:[%s1 + $0x14] sm:$0xf]
    %v56 = vld [vmem:[%s1 + $0x18] sm:$0xf]
    %v57 = vld [vmem:[%s1 + $0x1c] sm:$0xf]
    %v58 = vld [vmem:[%s1 + $0x20] sm:$0xf]
    %v59 = vld [vmem:[%s1 + $0x24] sm:$0xf]
    %v60 = vld [vmem:[%s1 + $0x28] sm:$0xf]
    %v61 = vld [vmem:[%s1 + $0x2c] sm:$0xf]
    %v74 = vunpack.c.l.b16 %v50
    %v75 = vunpack.c.l.b16 %v51
    %v76 = vunpack.c.l.b16 %v52
    %v77 = vunpack.c.l.b16 %v53
    %v78 = vunpack.c.l.b16 %v54
    %v79 = vunpack.c.l.b16 %v55
    %v80 = vunpack.c.l.b16 %v56
    %v81 = vunpack.c.l.b16 %v57
    %v82 = vunpack.c.l.b16 %v58
    %v83 = vunpack.c.l.b16 %v59
    %v84 = vunpack.c.l.b16 %v60
    %v85 = vunpack.c.l.b16 %v61
    %v86 = vpack.c.b16 %v75, %v74
    %v87 = vpack.c.b16 %v77, %v76
    %v88 = vpack.c.b16 %v79, %v78
    %v89 = vpack.c.b16 %v81, %v80
    %v90 = vpack.c.b16 %v83, %v82
    %v91 = vpack.c.b16 %v85, %v84
    %v99 = vsel %vm14, %v49, 0
    %101 = vmatprep.subr.bf16.mxu0 0
    %102 = vmatpush1.bf16.msra.mxu0 0
    %103 = vmatprep.subr.bf16.mxu0 0
    %104 = vmatpush1.bf16.msra.mxu0 0
    %105 = vmatprep.subr.bf16.mxu0 0
    %106 = vmatpush1.bf16.msra.mxu0 %v91
    %107 = vmatprep.subr.bf16.mxu0 0
    %108 = vmatpush1.bf16.msra.mxu0 %v90
    %109 = vmatprep.subr.bf16.mxu0 0
    %110 = vmatpush1.bf16.msra.mxu0 %v89
    %111 = vmatprep.subr.bf16.mxu0 0
    %112 = vmatpush1.bf16.msra.mxu0 %v88
    %113 = vmatprep.subr.bf16.mxu0 0
    %114 = vmatpush1.bf16.msra.mxu0 %v87
    %115 = vmatprep.subr.bf16.mxu0 0
    %116 = vmatpush1.bf16.msra.mxu0 %v86
    %117 = vmatprep.subr.bf16.mxu0 0
    %118 = vmatpush2.bf16.msra.mxu0 0
    %119 = vmatprep.subr.bf16.mxu0 0
    %120 = vmatpush2.bf16.msra.mxu0 0
    %121 = vmatprep.subr.bf16.mxu0 0
    %122 = vmatpush2.bf16.msra.mxu0 0
    %123 = vmatprep.subr.bf16.mxu0 0
    %124 = vmatpush2.bf16.msra.mxu0 0
    %125 = vmatprep.subr.bf16.mxu0 0
    %126 = vmatpush2.bf16.msra.mxu0 0
    %127 = vmatprep.subr.bf16.mxu0 0
    %128 = vmatpush2.bf16.msra.mxu0 0
    %129 = vmatprep.subr.bf16.mxu0 0
    %130 = vmatpush2.bf16.msra.mxu0 0
    %131 = vmatprep.subr.bf16.mxu0 0
    %132 = vmatpush2.bf16.msra.mxu0 0
    %133 = vmatprep.mubr.bf16.mxu0 0
    %134 = vmatmul.mubr.bf16.gmra.mxu0 %v99
    %v135 = vpop.f32.mrf.mxu0
    %v136 = vadd.f32 0.0, %v135
    %v137 = vpop.f32.mrf.mxu0
    %v138 = vpop.f32.mrf.mxu0
    %v139 = vpop.f32.mrf.mxu0
    %140 = vdwg.mxu0
    %v141 = vmax.f32 %v136, 0.0
    %v142 = vpack.c.bf16 %v141, %v141
    %vm143 = vcmask 257024
    %144 = vst.msk [vmem:[#allocation2] sm:$0xf] %vm143, %v142
    // Predicated region
    $region10: #{tpu_custom_call.1} parent=1 // pred_check
      _
    $region11: #{tpu_custom_call.1} parent=1 // pred_check_branch
      %146 = sbr.rel (0) target = $region13
    $region12: #{tpu_custom_call.1} parent=1 // pred_region
      %s148 = ssub.s32 64, 64
      %149 = vsyncadd [#allocation3], %s148
      %s151 = sshll.u32 [#allocation2], 4
      %s152 = int_to_ptr.vmem [resolvable:$true] %s151
      %154 = dma.vmem_to_hbm [thread:$0]  %s152, 64, %s2, [#allocation3]
    $region13: #{tpu_custom_call.1} parent=1 // pred_fallthru
      _
    // Predicated region
    $region14: #{tpu_custom_call.1} parent=1 // pred_check
      _
    $region15: #{tpu_custom_call.1} parent=1 // pred_check_branch
      %156 = sbr.rel (0) target = $region17
    $region16: #{tpu_custom_call.1} parent=1 // pred_region
      %157 = dma.done [#allocation3], 64
    $region17: #{tpu_custom_call.1} parent=1 // pred_fallthru
      _
    %158 = vsyncpa [#allocation3], 1

</llo_original>
